<compile_context>
chip_gen: v7x
topology: tpu7x:2x2x1
jax: 0.10.0
libtpu: 0.0.40
codegen_flags: <defaults>
</compile_context>

<pallas_src>
import math

import jax
import jax.numpy as jnp
import numpy as np
from jax.experimental import pallas as pl
from jax.experimental.pallas import tpu as pltpu

# ----------------------------- configuration ------------------------------
B, L = 2, 8          # batch_size, max_session_len
D = 4                # n_demand
H = 32               # hidden_size
EC = 32              # embedding_dim_c (== H so predict_catgy_fun='dot' is valid)
C = 20               # n_categories
N = 16               # n_items

LANES = 128
DH = D * H           # 128 -> demand axis lives on lanes, vreg-aligned

# Output slab layout (rows, 128):
_R_EMB = 0                       # rows [0, 32)   : emb_all (B*L + N, EC)
_R_SRAW = B * L + N              # rows [32, 48)  : demand_score raw (B*L, D)
_R_SCAND = _R_SRAW + B * L       # rows [48, 80)  : demand_score_candidate (B*N, D)
_R_CATG = _R_SCAND + B * N       # rows [80, 82)  : catgy_score (B, D*C); loss in lanes >= D*C
SLAB_ROWS = _R_CATG + 8          # 88 rows, multiple of 8


def _pad_lanes(x):
    """Right-pad the lane (last) dim with zeros to a full 128-wide slab row."""
    r, c = x.shape
    if c == LANES:
        return x
    return jnp.concatenate([x, jnp.zeros((r, LANES - c), jnp.float32)], axis=-1)


# ------------------------------- kernel ------------------------------------
def _fused_kernel(ids_ref, emb_ref, wdem_ref, wkc_ref, bkc_ref, wagg_ref,
                  wsb_ref, out_ref):
    """Whole DemandExtraction forward in one launch.

    ids   : (B*L + N, 1) int32  session ids (rows 0:B*L) + candidate ids.
    emb   : (C, EC)             embedding table (row 0 is the padding row).
    wdem  : (EC, D*H)           W_dem.T  (demand axis on lanes, d-major).
    wkc   : (EC, D*H)           W_key.T @ tile(W1_key_half)  (composed, tiled).
    bkc   : (1, D*H)            composed bias (b_key @ tile(W1k) + tile(b1)).
    wagg  : (D*H, D*H + D*C)    [blockdiag(W1_agg_half) | blockdiag(emb.T)].
    wsb   : (D*H, D)            block-diagonal w_score selector.
    """
    # ---- fused embedding gather: one-hot @ table on the (idle) MXU ----
    ids = ids_ref[...]                                                   # (BL+N, 1)
    cls = jax.lax.broadcasted_iota(jnp.int32, (B * L + N, C), 1)
    onehot = (ids == cls).astype(jnp.float32)                            # (BL+N, C)
    emb_all = jnp.dot(onehot, emb_ref[...],
                      preferred_element_type=jnp.float32)                # (BL+N, EC)
    # TODO(synk): nn.Dropout(p=0.25) is treated as identity (inference mode).

    # ---- demand hidden (session rows only); lanes = (d-major, H) blocks ----
    hd = jnp.dot(emb_all[:B * L], wdem_ref[...],
                 preferred_element_type=jnp.float32)                     # (B*L, 128)

    # ---- exp-sum-log aggregation over the sequence dim (matches torch;
    #      intentionally unstabilized logsumexp). exp/log each run once. ----
    e = jnp.exp(hd)                                                      # (B*L, 128)
    esum = jnp.concatenate(
        [jnp.sum(e[b * L:(b + 1) * L], axis=0, keepdims=True) for b in range(B)],
        axis=0)                                                          # (B, 128)
    agg_flat = jnp.log(esum)                                             # (B, 128)

    # ---- agg MLP projection + category dot scores in ONE matmul ----
    proj = jnp.dot(agg_flat, wagg_ref[...],
                   preferred_element_type=jnp.float32)                   # (B, 128+80)
    a_proj = proj[:, :DH]                                                # (B, 128)  vreg-aligned
    catg_flat = proj[:, DH:]                                             # (B, D*C)

    # ---- keys (session + candidate) already composed with W1 key half ----
    kc = jnp.dot(emb_all, wkc_ref[...],
                 preferred_element_type=jnp.float32) + bkc_ref[...]      # (BL+N, 128)
    kc_sess = kc[:B * L]                                                 # (B*L, 128)
    kc_cand = kc[B * L:]                                                 # (N, 128)

    # ---- demand scores: full-width relu adds + one block-diag MXU reduce ----
    parts = [kc_sess[b * L:(b + 1) * L] + a_proj[b:b + 1] for b in range(B)]
    parts += [kc_cand + a_proj[b:b + 1] for b in range(B)]
    h = jnp.maximum(jnp.concatenate(parts, axis=0), 0.0)                 # (B*L + B*N, 128)
    scores = jnp.dot(h, wsb_ref[...],
                     preferred_element_type=jnp.float32)                 # (B*L + B*N, D)
    sraw2d = scores[:B * L]                                              # (B*L, D)  rows (b, l)
    scand_nd = scores[B * L:]                                            # (B*N, D)  rows (b, n)

    # ---- demand similarity loss (tiny filler block; rsqrt on the EUP) ----
    eps2 = 1e-16                                                         # (= torch eps 1e-8, squared)
    hats = []
    for d in range(D):
        blk = agg_flat[:, d * H:(d + 1) * H]                             # (B, H)
        inv = jax.lax.rsqrt(jnp.maximum(
            jnp.sum(blk * blk, axis=-1, keepdims=True), eps2))           # (B, 1)
        hats.append(blk * inv)
    loss2d = jnp.zeros((1, 1), jnp.float32)
    for i in range(D):
        for j in range(i + 1, D):
            cos_ij = jnp.sum(hats[i] * hats[j], axis=-1, keepdims=True)  # (B, 1)
            mean_ij = jnp.sum(cos_ij, axis=0, keepdims=True) / float(B)  # (1, 1)
            loss2d = loss2d + jnp.maximum(mean_ij, 0.0)
    loss2d = loss2d * (2.0 / float(D * (D - 1)))                         # ordered-pair mean

    # ---- pack everything into one lane-dense (SLAB_ROWS, 128) slab ----
    # loss lives in the (otherwise zero) padding lanes of the category rows.
    catg_rows = jnp.concatenate(
        [catg_flat, jnp.broadcast_to(loss2d, (B, LANES - D * C))], axis=-1)  # (B, 128)
    out_ref[...] = jnp.concatenate(
        [_pad_lanes(emb_all),                          # rows [0, 32)
         _pad_lanes(sraw2d),                           # rows [32, 48)
         _pad_lanes(scand_nd),                         # rows [48, 80)
         catg_rows,                                    # rows [80, 82)
         jnp.zeros((8 - B, LANES), jnp.float32)],      # rows [82, 88) pad
        axis=0)                                        # (88, 128)


# ------------------------------ forward glue -------------------------------
def prepare_params(params):
    """One-time (outside jit) weight prep: transpose / tile / block-diagonalise
    so the kernel sees only vreg-aligned, lane-dense operands."""
    hi = jax.lax.Precision.HIGHEST
    eye_d = jnp.eye(D, dtype=jnp.float32)
    W1 = params["W1"]                                     # (H, 2H)
    W1d_T = W1[:, :H].T                                   # (H, H) agg half
    W1k_T = W1[:, H:].T                                   # (H, H) key half

    # key_linear composed with the key half of the score MLP, tiled over d.
    W1k_tiled = jnp.tile(W1k_T, (1, D))                   # (H, D*H)
    Wk_comp = jnp.dot(params["W_key"].T, W1k_tiled, precision=hi)        # (EC, D*H)
    b_comp = (jnp.dot(params["b_key"].reshape(1, H), W1k_tiled, precision=hi)
              + jnp.tile(params["b1"].reshape(1, H), (1, D)))            # (1, D*H)

    # agg half of W1 and emb.T (category dot) fused as block-diagonals.
    W1d_blk = jnp.kron(eye_d, W1d_T)                      # (D*H, D*H)
    embT_blk = jnp.kron(eye_d, params["emb"].T)           # (D*H, D*C)
    W_agg_fused = jnp.concatenate([W1d_blk, embT_blk], axis=1)           # (D*H, D*H + D*C)

    # w_score as a block-diagonal selector: relu_hidden @ ws_blk -> per-d score.
    ws_blk = jnp.kron(eye_d, params["w_score"].reshape(H, 1))            # (D*H, D)

    return dict(
        emb=params["emb"],                 # (C, EC) raw table (in-kernel one-hot gather)
        W_dem_T=params["W_dem"].T,         # (EC, D*H)
        Wk_comp=Wk_comp,
        b_comp=b_comp,
        W_agg_fused=W_agg_fused,
        ws_blkdiag=ws_blk,
    )


def demand_extraction_forward(prep, input_ids, candidate_ids):
    ids_all = jnp.concatenate(
        [input_ids.reshape(-1), candidate_ids.reshape(-1)], axis=0
    ).astype(jnp.int32).reshape(-1, 1)                                   # (B*L+N, 1)

    slab = pl.pallas_call(
        _fused_kernel,
        out_shape=jax.ShapeDtypeStruct((SLAB_ROWS, LANES), jnp.float32),
    )(ids_all, prep["emb"], prep["W_dem_T"], prep["Wk_comp"], prep["b_comp"],
      prep["W_agg_fused"], prep["ws_blkdiag"])

    emb_all = slab[_R_EMB:_R_EMB + B * L + N, :EC]
    embedding = emb_all[:B * L].reshape(B, L, EC)
    embedding_candidate = emb_all[B * L:]                                # (N, EC)

    sraw = slab[_R_SRAW:_R_SRAW + B * L, :D]                             # (B*L, D)
    scand_nd = slab[_R_SCAND:_R_SCAND + B * N, :D]                       # (B*N, D)
    catg = slab[_R_CATG:_R_CATG + B, :D * C]                             # (B, D*C)
    demand_sim_loss = slab[_R_CATG, D * C]

    # PyTorch applies .view(B, n_demand, L) to a contiguous (B, L, n_demand, 1)
    # tensor: a raw row-major reinterpretation, NOT a transpose.
    demand_score = sraw.reshape(B, D, L)
    demand_score_candidate = scand_nd.reshape(B, N, D).transpose(0, 2, 1)
    catgy_score = catg.reshape(B, D, C)

    return (catgy_score, demand_score, demand_score_candidate,
            embedding, embedding_candidate, demand_sim_loss)


# ------------------------------ pure-JAX ref --------------------------------
def reference_forward(params, input_ids, candidate_ids):
    emb_w = params["emb"]
    emb = jnp.take(emb_w, input_ids, axis=0)
    emb_cand = jnp.take(emb_w, candidate_ids, axis=0)
    hk = emb @ params["W_key"].T + params["b_key"]
    hd = (emb @ params["W_dem"].T).reshape(B, L, D, H)
    agg = jnp.log(jnp.sum(jnp.exp(hd), axis=1))
    eps = 1e-8
    norms = jnp.maximum(jnp.linalg.norm(agg, axis=-1), eps)
    cos = jnp.einsum("bih,bjh->bij", agg, agg) / (norms[:, :, None] * norms[:, None, :])
    mean_b = jnp.mean(cos, axis=0)
    mask = 1.0 - jnp.eye(D)
    loss = jnp.sum(jnp.maximum(mean_b, 0.0) * mask) / (D * (D - 1))
    hkc = emb_cand @ params["W_key"].T + params["b_key"]
    W1, b1, wsc = params["W1"], params["b1"], params["w_score"]
    key_rep = jnp.broadcast_to(hk[:, :, None, :], (B, L, D, H))
    agg_rep = jnp.broadcast_to(agg[:, None, :, :], (B, L, D, H))
    h = jnp.maximum(jnp.concatenate([agg_rep, key_rep], axis=-1) @ W1.T + b1, 0.0)
    demand_score = (h @ wsc).reshape(B, D, L)
    kc_rep = jnp.broadcast_to(hkc[None, None, :, :], (B, D, N, H))
    agg_rep2 = jnp.broadcast_to(agg[:, :, None, :], (B, D, N, H))
    hc = jnp.maximum(jnp.concatenate([agg_rep2, kc_rep], axis=-1) @ W1.T + b1, 0.0)
    demand_score_candidate = hc @ wsc
    catgy_score = jnp.einsum("bdh,ch->bdc", agg, emb_w)
    return (catgy_score, demand_score, demand_score_candidate, emb, emb_cand, loss)


# ---------------------------------- main ------------------------------------
if __name__ == "__main__":
    key = jax.random.PRNGKey(0)
    ks = jax.random.split(key, 9)

    def unif(k, shape, bound):
        return jax.random.uniform(k, shape, jnp.float32, -bound, bound)

    emb = jax.random.normal(ks[0], (C, EC), jnp.float32) * 0.5
    emb = emb.at[0].set(0.0)  # padding_idx=0

    params = dict(
        emb=emb,
        W_key=unif(ks[1], (H, EC), 1.0 / math.sqrt(EC)),
        b_key=unif(ks[2], (H,), 1.0 / math.sqrt(EC)),
        W_dem=unif(ks[3], (D * H, EC), 1.0 / math.sqrt(EC)),
        W1=unif(ks[4], (H, 2 * H), 1.0 / math.sqrt(2 * H)),
        b1=unif(ks[5], (H,), 1.0 / math.sqrt(2 * H)),
        w_score=unif(ks[6], (H,), 1.0 / math.sqrt(H)),
    )

    input_ids = jax.random.randint(ks[7], (B, L), 0, C)       # session category ids
    candidate_ids = jax.random.randint(ks[8], (N,), 1, C)     # candidate pool categories

    prep = prepare_params(params)                              # one-time, outside jit
    fwd = jax.jit(demand_extraction_forward)
    outs = fwd(prep, input_ids, candidate_ids)
    outs = jax.block_until_ready(outs)

    with jax.default_matmul_precision("highest"):
        ref = reference_forward(params, input_ids, candidate_ids)
    for o, r in zip(outs, ref):
        np.testing.assert_allclose(np.asarray(o), np.asarray(r), rtol=2e-3, atol=2e-3)

    print("KERNEL_OK")
</pallas_src>

<mosaic_0001>
module attributes {stable_mosaic.version = 11 : i64} {
  func.func @_fused_kernel(%arg0: memref<32x1xi32, #tpu.memory_space<vmem>>, %arg1: memref<20x32xf32, #tpu.memory_space<vmem>>, %arg2: memref<32x128xf32, #tpu.memory_space<vmem>>, %arg3: memref<32x128xf32, #tpu.memory_space<vmem>>, %arg4: memref<1x128xf32, #tpu.memory_space<vmem>>, %arg5: memref<128x208xf32, #tpu.memory_space<vmem>>, %arg6: memref<128x4xf32, #tpu.memory_space<vmem>>, %arg7: memref<88x128xf32, #tpu.memory_space<vmem>>) attributes {dimension_semantics = [], scalar_prefetch = 0 : i64, scratch_operands = 0 : i64, tpu.core_type = #tpu.core_type<tc>} {
    %c0 = arith.constant 0 : index
    %c0_0 = arith.constant 0 : index
    %0 = vector.load %arg0[%c0, %c0_0] : memref<32x1xi32, #tpu.memory_space<vmem>>, vector<32x1xi32>
    %1 = tpu.iota {dimensions = array<i32: 1>} : vector<32x20xi32>
    %2 = vector.broadcast %0 : vector<32x1xi32> to vector<32x20xi32>
    %3 = arith.cmpi eq, %2, %1 : vector<32x20xi32>
    %4 = arith.extui %3 : vector<32x20xi1> to vector<32x20xi32>
    %5 = arith.sitofp %4 : vector<32x20xi32> to vector<32x20xf32>
    %c0_1 = arith.constant 0 : index
    %c0_2 = arith.constant 0 : index
    %6 = vector.load %arg1[%c0_1, %c0_2] : memref<20x32xf32, #tpu.memory_space<vmem>>, vector<20x32xf32>
    %cst = arith.constant dense<0.000000e+00> : vector<32x32xf32>
    %7 = tpu.matmul %5, %6, %cst {dimension_numbers = #tpu.dot_dimension_numbers<[1], [0], [0], [1], [0, 0, 1, 1], [], []>} : vector<32x20xf32>, vector<20x32xf32>, vector<32x32xf32> -> vector<32x32xf32>
    %8 = vector.extract_strided_slice %7 {offsets = [0, 0], sizes = [16, 32], strides = [1, 1]} : vector<32x32xf32> to vector<16x32xf32>
    %c0_3 = arith.constant 0 : index
    %c0_4 = arith.constant 0 : index
    %9 = vector.load %arg2[%c0_3, %c0_4] : memref<32x128xf32, #tpu.memory_space<vmem>>, vector<32x128xf32>
    %cst_5 = arith.constant dense<0.000000e+00> : vector<16x128xf32>
    %10 = tpu.matmul %8, %9, %cst_5 {dimension_numbers = #tpu.dot_dimension_numbers<[1], [0], [0], [1], [0, 0, 1, 1], [], []>} : vector<16x32xf32>, vector<32x128xf32>, vector<16x128xf32> -> vector<16x128xf32>
    %11 = math.exp %10 : vector<16x128xf32>
    %12 = vector.extract_strided_slice %11 {offsets = [0, 0], sizes = [8, 128], strides = [1, 1]} : vector<16x128xf32> to vector<8x128xf32>
    %cst_6 = arith.constant dense<0.000000e+00> : vector<128xf32>
    %13 = vector.multi_reduction <add>, %12, %cst_6 [0] : vector<8x128xf32> to vector<128xf32>
    %14 = vector.shape_cast %13 : vector<128xf32> to vector<1x128xf32>
    %15 = vector.extract_strided_slice %11 {offsets = [8, 0], sizes = [8, 128], strides = [1, 1]} : vector<16x128xf32> to vector<8x128xf32>
    %cst_7 = arith.constant dense<0.000000e+00> : vector<128xf32>
    %16 = vector.multi_reduction <add>, %15, %cst_7 [0] : vector<8x128xf32> to vector<128xf32>
    %17 = vector.shape_cast %16 : vector<128xf32> to vector<1x128xf32>
    %18 = tpu.concatenate %14, %17 in 0 : vector<1x128xf32>, vector<1x128xf32> -> vector<2x128xf32>
    %19 = math.log %18 : vector<2x128xf32>
    %c0_8 = arith.constant 0 : index
    %c0_9 = arith.constant 0 : index
    %20 = vector.load %arg5[%c0_8, %c0_9] : memref<128x208xf32, #tpu.memory_space<vmem>>, vector<128x208xf32>
    %cst_10 = arith.constant dense<0.000000e+00> : vector<2x208xf32>
    %21 = tpu.matmul %19, %20, %cst_10 {dimension_numbers = #tpu.dot_dimension_numbers<[1], [0], [0], [1], [0, 0, 1, 1], [], []>} : vector<2x128xf32>, vector<128x208xf32>, vector<2x208xf32> -> vector<2x208xf32>
    %22 = vector.extract_strided_slice %21 {offsets = [0, 0], sizes = [2, 128], strides = [1, 1]} : vector<2x208xf32> to vector<2x128xf32>
    %23 = vector.extract_strided_slice %21 {offsets = [0, 128], sizes = [2, 80], strides = [1, 1]} : vector<2x208xf32> to vector<2x80xf32>
    %c0_11 = arith.constant 0 : index
    %c0_12 = arith.constant 0 : index
    %24 = vector.load %arg3[%c0_11, %c0_12] : memref<32x128xf32, #tpu.memory_space<vmem>>, vector<32x128xf32>
    %cst_13 = arith.constant dense<0.000000e+00> : vector<32x128xf32>
    %25 = tpu.matmul %7, %24, %cst_13 {dimension_numbers = #tpu.dot_dimension_numbers<[1], [0], [0], [1], [0, 0, 1, 1], [], []>} : vector<32x32xf32>, vector<32x128xf32>, vector<32x128xf32> -> vector<32x128xf32>
    %c0_14 = arith.constant 0 : index
    %c0_15 = arith.constant 0 : index
    %26 = vector.load %arg4[%c0_14, %c0_15] : memref<1x128xf32, #tpu.memory_space<vmem>>, vector<1x128xf32>
    %27 = vector.broadcast %26 : vector<1x128xf32> to vector<32x128xf32>
    %28 = arith.addf %25, %27 : vector<32x128xf32>
    %29 = vector.extract_strided_slice %28 {offsets = [0, 0], sizes = [16, 128], strides = [1, 1]} : vector<32x128xf32> to vector<16x128xf32>
    %30 = vector.extract_strided_slice %28 {offsets = [16, 0], sizes = [16, 128], strides = [1, 1]} : vector<32x128xf32> to vector<16x128xf32>
    %31 = vector.extract_strided_slice %29 {offsets = [0, 0], sizes = [8, 128], strides = [1, 1]} : vector<16x128xf32> to vector<8x128xf32>
    %32 = vector.extract_strided_slice %22 {offsets = [0, 0], sizes = [1, 128], strides = [1, 1]} : vector<2x128xf32> to vector<1x128xf32>
    %33 = vector.broadcast %32 : vector<1x128xf32> to vector<8x128xf32>
    %34 = arith.addf %31, %33 : vector<8x128xf32>
    %35 = vector.extract_strided_slice %29 {offsets = [8, 0], sizes = [8, 128], strides = [1, 1]} : vector<16x128xf32> to vector<8x128xf32>
    %36 = vector.extract_strided_slice %22 {offsets = [1, 0], sizes = [1, 128], strides = [1, 1]} : vector<2x128xf32> to vector<1x128xf32>
    %37 = vector.broadcast %36 : vector<1x128xf32> to vector<8x128xf32>
    %38 = arith.addf %35, %37 : vector<8x128xf32>
    %39 = vector.extract_strided_slice %22 {offsets = [0, 0], sizes = [1, 128], strides = [1, 1]} : vector<2x128xf32> to vector<1x128xf32>
    %40 = vector.broadcast %39 : vector<1x128xf32> to vector<16x128xf32>
    %41 = arith.addf %30, %40 : vector<16x128xf32>
    %42 = vector.extract_strided_slice %22 {offsets = [1, 0], sizes = [1, 128], strides = [1, 1]} : vector<2x128xf32> to vector<1x128xf32>
    %43 = vector.broadcast %42 : vector<1x128xf32> to vector<16x128xf32>
    %44 = arith.addf %30, %43 : vector<16x128xf32>
    %45 = tpu.concatenate %34, %38, %41, %44 in 0 : vector<8x128xf32>, vector<8x128xf32>, vector<16x128xf32>, vector<16x128xf32> -> vector<48x128xf32>
    %cst_16 = arith.constant 0.000000e+00 : f32
    %46 = vector.broadcast %cst_16 : f32 to vector<48x128xf32>
    %47 = arith.maximumf %45, %46 : vector<48x128xf32>
    %c0_17 = arith.constant 0 : index
    %c0_18 = arith.constant 0 : index
    %48 = vector.load %arg6[%c0_17, %c0_18] : memref<128x4xf32, #tpu.memory_space<vmem>>, vector<128x4xf32>
    %cst_19 = arith.constant dense<0.000000e+00> : vector<48x4xf32>
    %49 = tpu.matmul %47, %48, %cst_19 {dimension_numbers = #tpu.dot_dimension_numbers<[1], [0], [0], [1], [0, 0, 1, 1], [], []>} : vector<48x128xf32>, vector<128x4xf32>, vector<48x4xf32> -> vector<48x4xf32>
    %50 = vector.extract_strided_slice %49 {offsets = [0, 0], sizes = [16, 4], strides = [1, 1]} : vector<48x4xf32> to vector<16x4xf32>
    %51 = vector.extract_strided_slice %49 {offsets = [16, 0], sizes = [32, 4], strides = [1, 1]} : vector<48x4xf32> to vector<32x4xf32>
    %52 = vector.extract_strided_slice %19 {offsets = [0, 0], sizes = [2, 32], strides = [1, 1]} : vector<2x128xf32> to vector<2x32xf32>
    %53 = arith.mulf %52, %52 : vector<2x32xf32>
    %cst_20 = arith.constant dense<0.000000e+00> : vector<2xf32>
    %54 = vector.multi_reduction <add>, %53, %cst_20 [1] : vector<2x32xf32> to vector<2xf32>
    %55 = vector.shape_cast %54 : vector<2xf32> to vector<2x1xf32>
    %cst_21 = arith.constant 1.000000e-16 : f32
    %56 = vector.broadcast %cst_21 : f32 to vector<2x1xf32>
    %57 = arith.maximumf %55, %56 : vector<2x1xf32>
    %58 = math.rsqrt %57 : vector<2x1xf32>
    %59 = vector.broadcast %58 : vector<2x1xf32> to vector<2x32xf32>
    %60 = arith.mulf %52, %59 : vector<2x32xf32>
    %61 = vector.extract_strided_slice %19 {offsets = [0, 32], sizes = [2, 32], strides = [1, 1]} : vector<2x128xf32> to vector<2x32xf32>
    %62 = arith.mulf %61, %61 : vector<2x32xf32>
    %cst_22 = arith.constant dense<0.000000e+00> : vector<2xf32>
    %63 = vector.multi_reduction <add>, %62, %cst_22 [1] : vector<2x32xf32> to vector<2xf32>
    %64 = vector.shape_cast %63 : vector<2xf32> to vector<2x1xf32>
    %cst_23 = arith.constant 1.000000e-16 : f32
    %65 = vector.broadcast %cst_23 : f32 to vector<2x1xf32>
    %66 = arith.maximumf %64, %65 : vector<2x1xf32>
    %67 = math.rsqrt %66 : vector<2x1xf32>
    %68 = vector.broadcast %67 : vector<2x1xf32> to vector<2x32xf32>
    %69 = arith.mulf %61, %68 : vector<2x32xf32>
    %70 = vector.extract_strided_slice %19 {offsets = [0, 64], sizes = [2, 32], strides = [1, 1]} : vector<2x128xf32> to vector<2x32xf32>
    %71 = arith.mulf %70, %70 : vector<2x32xf32>
    %cst_24 = arith.constant dense<0.000000e+00> : vector<2xf32>
    %72 = vector.multi_reduction <add>, %71, %cst_24 [1] : vector<2x32xf32> to vector<2xf32>
    %73 = vector.shape_cast %72 : vector<2xf32> to vector<2x1xf32>
    %cst_25 = arith.constant 1.000000e-16 : f32
    %74 = vector.broadcast %cst_25 : f32 to vector<2x1xf32>
    %75 = arith.maximumf %73, %74 : vector<2x1xf32>
    %76 = math.rsqrt %75 : vector<2x1xf32>
    %77 = vector.broadcast %76 : vector<2x1xf32> to vector<2x32xf32>
    %78 = arith.mulf %70, %77 : vector<2x32xf32>
    %79 = vector.extract_strided_slice %19 {offsets = [0, 96], sizes = [2, 32], strides = [1, 1]} : vector<2x128xf32> to vector<2x32xf32>
    %80 = arith.mulf %79, %79 : vector<2x32xf32>
    %cst_26 = arith.constant dense<0.000000e+00> : vector<2xf32>
    %81 = vector.multi_reduction <add>, %80, %cst_26 [1] : vector<2x32xf32> to vector<2xf32>
    %82 = vector.shape_cast %81 : vector<2xf32> to vector<2x1xf32>
    %cst_27 = arith.constant 1.000000e-16 : f32
    %83 = vector.broadcast %cst_27 : f32 to vector<2x1xf32>
    %84 = arith.maximumf %82, %83 : vector<2x1xf32>
    %85 = math.rsqrt %84 : vector<2x1xf32>
    %86 = vector.broadcast %85 : vector<2x1xf32> to vector<2x32xf32>
    %87 = arith.mulf %79, %86 : vector<2x32xf32>
    %cst_28 = arith.constant 0.000000e+00 : f32
    %88 = vector.broadcast %cst_28 : f32 to vector<1x1xf32>
    %89 = arith.mulf %60, %69 : vector<2x32xf32>
    %cst_29 = arith.constant dense<0.000000e+00> : vector<2xf32>
    %90 = vector.multi_reduction <add>, %89, %cst_29 [1] : vector<2x32xf32> to vector<2xf32>
    %91 = vector.shape_cast %90 : vector<2xf32> to vector<2x1xf32>
    %cst_30 = arith.constant dense<0.000000e+00> : vector<1xf32>
    %92 = vector.multi_reduction <add>, %91, %cst_30 [0] : vector<2x1xf32> to vector<1xf32>
    %93 = vector.shape_cast %92 : vector<1xf32> to vector<1x1xf32>
    %cst_31 = arith.constant 2.000000e+00 : f32
    %94 = vector.broadcast %cst_31 : f32 to vector<1x1xf32>
    %95 = arith.divf %93, %94 : vector<1x1xf32>
    %cst_32 = arith.constant 0.000000e+00 : f32
    %96 = vector.broadcast %cst_32 : f32 to vector<1x1xf32>
    %97 = arith.maximumf %95, %96 : vector<1x1xf32>
    %98 = arith.addf %88, %97 : vector<1x1xf32>
    %99 = arith.mulf %60, %78 : vector<2x32xf32>
    %cst_33 = arith.constant dense<0.000000e+00> : vector<2xf32>
    %100 = vector.multi_reduction <add>, %99, %cst_33 [1] : vector<2x32xf32> to vector<2xf32>
    %101 = vector.shape_cast %100 : vector<2xf32> to vector<2x1xf32>
    %cst_34 = arith.constant dense<0.000000e+00> : vector<1xf32>
    %102 = vector.multi_reduction <add>, %101, %cst_34 [0] : vector<2x1xf32> to vector<1xf32>
    %103 = vector.shape_cast %102 : vector<1xf32> to vector<1x1xf32>
    %cst_35 = arith.constant 2.000000e+00 : f32
    %104 = vector.broadcast %cst_35 : f32 to vector<1x1xf32>
    %105 = arith.divf %103, %104 : vector<1x1xf32>
    %cst_36 = arith.constant 0.000000e+00 : f32
    %106 = vector.broadcast %cst_36 : f32 to vector<1x1xf32>
    %107 = arith.maximumf %105, %106 : vector<1x1xf32>
    %108 = arith.addf %98, %107 : vector<1x1xf32>
    %109 = arith.mulf %60, %87 : vector<2x32xf32>
    %cst_37 = arith.constant dense<0.000000e+00> : vector<2xf32>
    %110 = vector.multi_reduction <add>, %109, %cst_37 [1] : vector<2x32xf32> to vector<2xf32>
    %111 = vector.shape_cast %110 : vector<2xf32> to vector<2x1xf32>
    %cst_38 = arith.constant dense<0.000000e+00> : vector<1xf32>
    %112 = vector.multi_reduction <add>, %111, %cst_38 [0] : vector<2x1xf32> to vector<1xf32>
    %113 = vector.shape_cast %112 : vector<1xf32> to vector<1x1xf32>
    %cst_39 = arith.constant 2.000000e+00 : f32
    %114 = vector.broadcast %cst_39 : f32 to vector<1x1xf32>
    %115 = arith.divf %113, %114 : vector<1x1xf32>
    %cst_40 = arith.constant 0.000000e+00 : f32
    %116 = vector.broadcast %cst_40 : f32 to vector<1x1xf32>
    %117 = arith.maximumf %115, %116 : vector<1x1xf32>
    %118 = arith.addf %108, %117 : vector<1x1xf32>
    %119 = arith.mulf %69, %78 : vector<2x32xf32>
    %cst_41 = arith.constant dense<0.000000e+00> : vector<2xf32>
    %120 = vector.multi_reduction <add>, %119, %cst_41 [1] : vector<2x32xf32> to vector<2xf32>
    %121 = vector.shape_cast %120 : vector<2xf32> to vector<2x1xf32>
    %cst_42 = arith.constant dense<0.000000e+00> : vector<1xf32>
    %122 = vector.multi_reduction <add>, %121, %cst_42 [0] : vector<2x1xf32> to vector<1xf32>
    %123 = vector.shape_cast %122 : vector<1xf32> to vector<1x1xf32>
    %cst_43 = arith.constant 2.000000e+00 : f32
    %124 = vector.broadcast %cst_43 : f32 to vector<1x1xf32>
    %125 = arith.divf %123, %124 : vector<1x1xf32>
    %cst_44 = arith.constant 0.000000e+00 : f32
    %126 = vector.broadcast %cst_44 : f32 to vector<1x1xf32>
    %127 = arith.maximumf %125, %126 : vector<1x1xf32>
    %128 = arith.addf %118, %127 : vector<1x1xf32>
    %129 = arith.mulf %69, %87 : vector<2x32xf32>
    %cst_45 = arith.constant dense<0.000000e+00> : vector<2xf32>
    %130 = vector.multi_reduction <add>, %129, %cst_45 [1] : vector<2x32xf32> to vector<2xf32>
    %131 = vector.shape_cast %130 : vector<2xf32> to vector<2x1xf32>
    %cst_46 = arith.constant dense<0.000000e+00> : vector<1xf32>
    %132 = vector.multi_reduction <add>, %131, %cst_46 [0] : vector<2x1xf32> to vector<1xf32>
    %133 = vector.shape_cast %132 : vector<1xf32> to vector<1x1xf32>
    %cst_47 = arith.constant 2.000000e+00 : f32
    %134 = vector.broadcast %cst_47 : f32 to vector<1x1xf32>
    %135 = arith.divf %133, %134 : vector<1x1xf32>
    %cst_48 = arith.constant 0.000000e+00 : f32
    %136 = vector.broadcast %cst_48 : f32 to vector<1x1xf32>
    %137 = arith.maximumf %135, %136 : vector<1x1xf32>
    %138 = arith.addf %128, %137 : vector<1x1xf32>
    %139 = arith.mulf %78, %87 : vector<2x32xf32>
    %cst_49 = arith.constant dense<0.000000e+00> : vector<2xf32>
    %140 = vector.multi_reduction <add>, %139, %cst_49 [1] : vector<2x32xf32> to vector<2xf32>
    %141 = vector.shape_cast %140 : vector<2xf32> to vector<2x1xf32>
    %cst_50 = arith.constant dense<0.000000e+00> : vector<1xf32>
    %142 = vector.multi_reduction <add>, %141, %cst_50 [0] : vector<2x1xf32> to vector<1xf32>
    %143 = vector.shape_cast %142 : vector<1xf32> to vector<1x1xf32>
    %cst_51 = arith.constant 2.000000e+00 : f32
    %144 = vector.broadcast %cst_51 : f32 to vector<1x1xf32>
    %145 = arith.divf %143, %144 : vector<1x1xf32>
    %cst_52 = arith.constant 0.000000e+00 : f32
    %146 = vector.broadcast %cst_52 : f32 to vector<1x1xf32>
    %147 = arith.maximumf %145, %146 : vector<1x1xf32>
    %148 = arith.addf %138, %147 : vector<1x1xf32>
    %cst_53 = arith.constant 0.166666672 : f32
    %149 = vector.broadcast %cst_53 : f32 to vector<1x1xf32>
    %150 = arith.mulf %148, %149 : vector<1x1xf32>
    %151 = vector.shape_cast %150 : vector<1x1xf32> to vector<1x1xf32>
    %152 = vector.broadcast %151 : vector<1x1xf32> to vector<2x48xf32>
    %153 = tpu.concatenate %23, %152 in 1 : vector<2x80xf32>, vector<2x48xf32> -> vector<2x128xf32>
    %cst_54 = arith.constant 0.000000e+00 : f32
    %154 = vector.broadcast %cst_54 : f32 to vector<32x96xf32>
    %155 = tpu.concatenate %7, %154 in 1 : vector<32x32xf32>, vector<32x96xf32> -> vector<32x128xf32>
    %cst_55 = arith.constant 0.000000e+00 : f32
    %156 = vector.broadcast %cst_55 : f32 to vector<16x124xf32>
    %157 = tpu.concatenate %50, %156 in 1 : vector<16x4xf32>, vector<16x124xf32> -> vector<16x128xf32>
    %cst_56 = arith.constant 0.000000e+00 : f32
    %158 = vector.broadcast %cst_56 : f32 to vector<32x124xf32>
    %159 = tpu.concatenate %51, %158 in 1 : vector<32x4xf32>, vector<32x124xf32> -> vector<32x128xf32>
    %cst_57 = arith.constant 0.000000e+00 : f32
    %160 = vector.broadcast %cst_57 : f32 to vector<6x128xf32>
    %161 = tpu.concatenate %155, %157, %159, %153, %160 in 0 : vector<32x128xf32>, vector<16x128xf32>, vector<32x128xf32>, vector<2x128xf32>, vector<6x128xf32> -> vector<88x128xf32>
    %c0_58 = arith.constant 0 : index
    %c0_59 = arith.constant 0 : index
    %162 = vector.load %arg7[%c0_58, %c0_59] : memref<88x128xf32, #tpu.memory_space<vmem>>, vector<88x128xf32>
    tpu.vector_store %arg7[%c0_58, %c0_59], %161 {strides = array<i32>} : memref<88x128xf32, #tpu.memory_space<vmem>>, vector<88x128xf32>,
    return
  }
}

</mosaic_0001>

<llo_original>
// kernel: demand_extraction_forward.1
$region0: #{demand_extraction_forward.1}
  #allocation0 [shape = 'u32[]', space=smem, size = 0x4, offset = 0x4, fixed_abs, tag = 'smem constant byte address 0x4 - core index']
  #allocation1 [shape = 'u32[144,128]{1,0:T(1,128)}', space=vmem, size = 0x12000, scoped, tag = 'internal scratch']
  %s0 = inlined_call_operand.vmem [shape: s32[32,1], index: 0, kind: input, shape index: {}]
  %s1 = inlined_call_operand.vmem [shape: f32[20,32], index: 1, kind: input, shape index: {}]
  %s2 = inlined_call_operand.vmem [shape: f32[32,128], index: 2, kind: input, shape index: {}]
  %s3 = inlined_call_operand.vmem [shape: f32[32,128], index: 3, kind: input, shape index: {}]
  %s4 = inlined_call_operand.vmem [shape: f32[1,128], index: 4, kind: input, shape index: {}]
  %s5 = inlined_call_operand.vmem [shape: f32[128,208], index: 5, kind: input, shape index: {}]
  %s6 = inlined_call_operand.vmem [shape: f32[128,4], index: 6, kind: input, shape index: {}]
  %s7 = inlined_call_operand.vmem [shape: f32[88,128], index: 7, kind: output, shape index: {}]
  %s8 = sld [smem:[#allocation0]]
  $region38: #{demand_extraction_forward.1} parent=0
    _
  %s10 = ssub.s32 1, %s8
  %s11 = scalar_select 0, %s10, %s8
  // Predicated region
  $region2: #{demand_extraction_forward.1} parent=0 // pred_check
    _
  $region3: #{demand_extraction_forward.1} parent=0 // pred_check_branch
    %13 = sbr.rel (0) target = $region5
  $region4: #{demand_extraction_forward.1} parent=0 // pred_region
    _
  $region5: #{demand_extraction_forward.1} parent=0 // pred_fallthru
    _
  // Predicated region
  $region6: #{demand_extraction_forward.1} parent=0 // pred_check
    _
  $region7: #{demand_extraction_forward.1} parent=0 // pred_check_branch
    %15 = sbr.rel (0) target = $region9
  $region8: #{demand_extraction_forward.1} parent=0 // pred_region
    _
  $region9: #{demand_extraction_forward.1} parent=0 // pred_fallthru
    _
  // Predicated region
  $region10: #{demand_extraction_forward.1} parent=0 // pred_check
    _
  $region11: #{demand_extraction_forward.1} parent=0 // pred_check_branch
    %17 = sbr.rel (0) target = $region13
  $region12: #{demand_extraction_forward.1} parent=0 // pred_region
    _
  $region13: #{demand_extraction_forward.1} parent=0 // pred_fallthru
    _
  // Predicated region
  $region14: #{demand_extraction_forward.1} parent=0 // pred_check
    _
  $region15: #{demand_extraction_forward.1} parent=0 // pred_check_branch
    %19 = sbr.rel (0) target = $region17
  $region16: #{demand_extraction_forward.1} parent=0 // pred_region
    _
  $region17: #{demand_extraction_forward.1} parent=0 // pred_fallthru
    _
  // Predicated region
  $region18: #{demand_extraction_forward.1} parent=0 // pred_check
    _
  $region19: #{demand_extraction_forward.1} parent=0 // pred_check_branch
    %21 = sbr.rel (0) target = $region21
  $region20: #{demand_extraction_forward.1} parent=0 // pred_region
    _
  $region21: #{demand_extraction_forward.1} parent=0 // pred_fallthru
    _
  // Predicated region
  $region22: #{demand_extraction_forward.1} parent=0 // pred_check
    _
  $region23: #{demand_extraction_forward.1} parent=0 // pred_check_branch
    %23 = sbr.rel (0) target = $region25
  $region24: #{demand_extraction_forward.1} parent=0 // pred_region
    _
  $region25: #{demand_extraction_forward.1} parent=0 // pred_fallthru
    _
  // Predicated region
  $region26: #{demand_extraction_forward.1} parent=0 // pred_check
    _
  $region27: #{demand_extraction_forward.1} parent=0 // pred_check_branch
    %25 = sbr.rel (0) target = $region29
  $region28: #{demand_extraction_forward.1} parent=0 // pred_region
    _
  $region29: #{demand_extraction_forward.1} parent=0 // pred_fallthru
    _
  %v26 = vld [vmem:[%s0] sm:$0xff]
  %v27 = vld [vmem:[%s0 + $0x8] sm:$0xff]
  %v28 = vld [vmem:[%s0 + $0x10] sm:$0xff]
  %v29 = vld [vmem:[%s0 + $0x18] sm:$0xff]
  %v30 = vlaneseq
  %v31 = vand.u32 %v30, 127
  %32 = vset.pattern.permute.xlu0 0
  %33 = vperm.xlu0 %32, %v26
  %v34 = vpop.permute.xlu0 %33
  %35 = vset.pattern.permute.xlu0 0
  %36 = vperm.xlu0 %35, %v27
  %v37 = vpop.permute.xlu0 %36
  %38 = vset.pattern.permute.xlu0 0
  %39 = vperm.xlu0 %38, %v28
  %v40 = vpop.permute.xlu0 %39
  %41 = vset.pattern.permute.xlu0 0
  %42 = vperm.xlu0 %41, %v29
  %v43 = vpop.permute.xlu0 %42
  %vm44 = vcmp.eq.s32.totalorder %v34, %v31
  %vm45 = vcmp.eq.s32.totalorder %v37, %v31
  %vm46 = vcmp.eq.s32.totalorder %v40, %v31
  %vm47 = vcmp.eq.s32.totalorder %v43, %v31
  %v48 = vsel %vm44, 1, 0
  %v49 = vsel %vm45, 1, 0
  %v50 = vsel %vm46, 1, 0
  %v51 = vsel %vm47, 1, 0
  %v52 = vcvt.s32.f32 %v48
  %v53 = vcvt.s32.f32 %v49
  %v54 = vcvt.s32.f32 %v50
  %v55 = vcvt.s32.f32 %v51
  %v56 = vld [vmem:[%s1] sm:$0xff]
  %v57 = vld [vmem:[%s1 + $0x8] sm:$0xff]
  %v58 = vld [vmem:[%s1 + $0x10] sm:$0xf]
  %vm59 = vcmask 162816
  %v61 = vsel %vm59, %v52, 0
  %v64 = vsel %vm59, %v53, 0
  %v67 = vsel %vm59, %v54, 0
  %v70 = vsel %vm59, %v55, 0
  %vm72 = vcmask 1043456
  %v74 = vsel %vm72, %v58, 0
  %76 = vmatprep.subr.mxu0 0.0
  %77 = vmatpush1.msra.mxu0 %v56
  %78 = vmatprep.subr.mxu0 0.0
  %79 = vmatpush1.msra.mxu0 %v57
  %80 = vmatprep.subr.mxu0 0.0
  %81 = vmatpush1.msra.mxu0 %v74
  %82 = vmatprep.subr.mxu0 0.0
  %83 = vmatpush1.msra.mxu0 0.0
  %84 = vmatprep.subr.mxu0 0.0
  %85 = vmatpush1.msra.mxu0 0.0
  %86 = vmatprep.subr.mxu0 0.0
  %87 = vmatpush1.msra.mxu0 0.0
  %88 = vmatprep.subr.mxu0 0.0
  %89 = vmatpush1.msra.mxu0 0.0
  %90 = vmatprep.subr.mxu0 0.0
  %91 = vmatpush1.msra.mxu0 0.0
  %92 = vmatprep.subr.mxu0 0.0
  %93 = vmatpush1.msra.mxu0 0.0
  %94 = vmatprep.subr.mxu0 0.0
  %95 = vmatpush1.msra.mxu0 0.0
  %96 = vmatprep.subr.mxu0 0.0
  %97 = vmatpush1.msra.mxu0 0.0
  %98 = vmatprep.subr.mxu0 0.0
  %99 = vmatpush1.msra.mxu0 0.0
  %100 = vmatprep.subr.mxu0 0.0
  %101 = vmatpush1.msra.mxu0 0.0
  %102 = vmatprep.subr.mxu0 0.0
  %103 = vmatpush1.msra.mxu0 0.0
  %104 = vmatprep.subr.mxu0 0.0
  %105 = vmatpush1.msra.mxu0 0.0
  %106 = vmatprep.subr.mxu0 0.0
  %107 = vmatpush1.msra.mxu0 0.0
  %108 = vmatprep.subr.mxu0 0.0
  %109 = vmatpush1.msra.mxu0 0.0
  %110 = vmatprep.subr.mxu0 0.0
  %111 = vmatpush1.msra.mxu0 0.0
  %112 = vmatprep.subr.mxu0 0.0
  %113 = vmatpush1.msra.mxu0 0.0
  %114 = vmatprep.subr.mxu0 0.0
  %115 = vmatpush1.msra.mxu0 0.0
  %116 = vmatprep.subr.mxu0 0.0
  %117 = vmatpush1.msra.mxu0 0.0
  %118 = vmatprep.subr.mxu0 0.0
  %119 = vmatpush1.msra.mxu0 0.0
  %120 = vmatprep.subr.mxu0 0.0
  %121 = vmatpush1.msra.mxu0 0.0
  %122 = vmatprep.subr.mxu0 0.0
  %123 = vmatpush1.msra.mxu0 0.0
  %124 = vmatprep.subr.mxu0 0.0
  %125 = vmatpush1.msra.mxu0 0.0
  %126 = vmatprep.subr.mxu0 0.0
  %127 = vmatpush1.msra.mxu0 0.0
  %128 = vmatprep.subr.mxu0 0.0
  %129 = vmatpush1.msra.mxu0 0.0
  %130 = vmatprep.subr.mxu0 0.0
  %131 = vmatpush1.msra.mxu0 0.0
  %132 = vmatprep.subr.mxu0 0.0
  %133 = vmatpush1.msra.mxu0 0.0
  %134 = vmatprep.subr.mxu0 0.0
  %135 = vmatpush1.msra.mxu0 0.0
  %136 = vmatprep.subr.mxu0 0.0
  %137 = vmatpush1.msra.mxu0 0.0
  %138 = vmatprep.subr.mxu0 0.0
  %139 = vmatpush1.msra.mxu0 0.0
  %140 = vmatprep.mubr.f32.mxu0 0.0
  %141 = vmatmul.mubr.f32.gmra.mrb[0].mxu0 %v61
  %v142 = vpop.f32.mrb[0].mxu0
  %v143 = vadd.f32 0.0, %v142
  %v144 = vpop.f32.mrb[0].mxu0
  %145 = vmatprep.mubr.f32.mxu0 0.0
  %146 = vmatmul.mubr.f32.gmra.mrb[0].mxu0 %v64
  %v147 = vpop.f32.mrb[0].mxu0
  %v148 = vadd.f32 0.0, %v147
  %v149 = vpop.f32.mrb[0].mxu0
  %150 = vmatprep.mubr.f32.mxu0 0.0
  %151 = vmatmul.mubr.f32.gmra.mrb[0].mxu0 %v67
  %v152 = vpop.f32.mrb[0].mxu0
  %v153 = vadd.f32 0.0, %v152
  %v154 = vpop.f32.mrb[0].mxu0
  %155 = vmatprep.mubr.f32.mxu0 0.0
  %156 = vmatmul.mubr.f32.gmra.mrb[0].mxu0 %v70
  %v157 = vpop.f32.mrb[0].mxu0
  %v158 = vadd.f32 0.0, %v157
  %v159 = vpop.f32.mrb[0].mxu0
  %160 = vdwg.mxu0
  %v161 = vld [vmem:[%s2] sm:$0xff]
  %v162 = vld [vmem:[%s2 + $0x8] sm:$0xff]
  %v163 = vld [vmem:[%s2 + $0x10] sm:$0xff]
  %v164 = vld [vmem:[%s2 + $0x18] sm:$0xff]
  %vm165 = vcmask 261120
  %v167 = vsel %vm165, %v143, 0
  %v170 = vsel %vm165, %v148, 0
  %172 = vmatprep.subr.mxu0 0.0
  %173 = vmatpush1.msra.mxu0 %v161
  %174 = vmatprep.subr.mxu0 0.0
  %175 = vmatpush1.msra.mxu0 %v162
  %176 = vmatprep.subr.mxu0 0.0
  %177 = vmatpush1.msra.mxu0 %v163
  %178 = vmatprep.subr.mxu0 0.0
  %179 = vmatpush1.msra.mxu0 %v164
  %180 = vmatprep.subr.mxu0 0.0
  %181 = vmatpush1.msra.mxu0 0.0
  %182 = vmatprep.subr.mxu0 0.0
  %183 = vmatpush1.msra.mxu0 0.0
  %184 = vmatprep.subr.mxu0 0.0
  %185 = vmatpush1.msra.mxu0 0.0
  %186 = vmatprep.subr.mxu0 0.0
  %187 = vmatpush1.msra.mxu0 0.0
  %188 = vmatprep.subr.mxu0 0.0
  %189 = vmatpush1.msra.mxu0 0.0
  %190 = vmatprep.subr.mxu0 0.0
  %191 = vmatpush1.msra.mxu0 0.0
  %192 = vmatprep.subr.mxu0 0.0
  %193 = vmatpush1.msra.mxu0 0.0
  %194 = vmatprep.subr.mxu0 0.0
  %195 = vmatpush1.msra.mxu0 0.0
  %196 = vmatprep.subr.mxu0 0.0
  %197 = vmatpush1.msra.mxu0 0.0
  %198 = vmatprep.subr.mxu0 0.0
  %199 = vmatpush1.msra.mxu0 0.0
  %200 = vmatprep.subr.mxu0 0.0
  %201 = vmatpush1.msra.mxu0 0.0
  %202 = vmatprep.subr.mxu0 0.0
  %203 = vmatpush1.msra.mxu0 0.0
  %204 = vmatprep.subr.mxu0 0.0
  %205 = vmatpush1.msra.mxu0 0.0
  %206 = vmatprep.subr.mxu0 0.0
  %207 = vmatpush1.msra.mxu0 0.0
  %208 = vmatprep.subr.mxu0 0.0
  %209 = vmatpush1.msra.mxu0 0.0
  %210 = vmatprep.subr.mxu0 0.0
  %211 = vmatpush1.msra.mxu0 0.0
  %212 = vmatprep.subr.mxu0 0.0
  %213 = vmatpush1.msra.mxu0 0.0
  %214 = vmatprep.subr.mxu0 0.0
  %215 = vmatpush1.msra.mxu0 0.0
  %216 = vmatprep.subr.mxu0 0.0
  %217 = vmatpush1.msra.mxu0 0.0
  %218 = vmatprep.subr.mxu0 0.0
  %219 = vmatpush1.msra.mxu0 0.0
  %220 = vmatprep.subr.mxu0 0.0
  %221 = vmatpush1.msra.mxu0 0.0
  %222 = vmatprep.subr.mxu0 0.0
  %223 = vmatpush1.msra.mxu0 0.0
  %224 = vmatprep.subr.mxu0 0.0
  %225 = vmatpush1.msra.mxu0 0.0
  %226 = vmatprep.subr.mxu0 0.0
  %227 = vmatpush1.msra.mxu0 0.0
  %228 = vmatprep.subr.mxu0 0.0
  %229 = vmatpush1.msra.mxu0 0.0
  %230 = vmatprep.subr.mxu0 0.0
  %231 = vmatpush1.msra.mxu0 0.0
  %232 = vmatprep.subr.mxu0 0.0
  %233 = vmatpush1.msra.mxu0 0.0
  %234 = vmatprep.subr.mxu0 0.0
  %235 = vmatpush1.msra.mxu0 0.0
  %236 = vmatprep.mubr.f32.mxu0 0.0
  %237 = vmatmul.mubr.f32.gmra.mrb[0].mxu0 %v167
  %v238 = vpop.f32.mrb[0].mxu0
  %v239 = vadd.f32 0.0, %v238
  %v240 = vpop.f32.mrb[0].mxu0
  %241 = vmatprep.mubr.f32.mxu0 0.0
  %242 = vmatmul.mubr.f32.gmra.mrb[0].mxu0 %v170
  %v243 = vpop.f32.mrb[0].mxu0
  %v244 = vadd.f32 0.0, %v243
  %v245 = vpop.f32.mrb[0].mxu0
  %246 = vdwg.mxu0
  %v247 = vmul.f32 %v239, 1.442695
  %v248 = vpow.pop %v247
  %v249 = vmul.f32 %v244, 1.442695
  %v250 = vpow.pop %v249
  %v251 = vrot.slane %v248, 4
  %v252 = vadd.f32 %v248, %v251
  %v253 = vrot.slane %v252, 2
  %v254 = vadd.f32 %v252, %v253
  %v255 = vrot.slane %v254, 1
  %v256 = vadd.f32 %v254, %v255
  %v257 = vrot.slane %v250, 4
  %v258 = vadd.f32 %v250, %v257
  %v259 = vrot.slane %v258, 2
  %v260 = vadd.f32 %v258, %v259
  %v261 = vrot.slane %v260, 1
  %v262 = vadd.f32 %v260, %v261
  %vm263 = vcmask 1040384
  %v264 = vsel %vm263, %v256, %v262
  %v265 = vlog2.pop %v264
  %v266 = vmul.f32 %v265, 0.6931472
  %v267 = vld [vmem:[%s5] sm:$0xff]
  %v268 = vld [vmem:[%s5 + $0x8] sm:$0xff]
  %v269 = vld [vmem:[%s5 + $0x10] sm:$0xff]
  %v270 = vld [vmem:[%s5 + $0x18] sm:$0xff]
  %v271 = vld [vmem:[%s5 + $0x20] sm:$0xff]
  %v272 = vld [vmem:[%s5 + $0x28] sm:$0xff]
  %v273 = vld [vmem:[%s5 + $0x30] sm:$0xff]
  %v274 = vld [vmem:[%s5 + $0x38] sm:$0xff]
  %v275 = vld [vmem:[%s5 + $0x40] sm:$0xff]
  %v276 = vld [vmem:[%s5 + $0x48] sm:$0xff]
  %v277 = vld [vmem:[%s5 + $0x50] sm:$0xff]
  %v278 = vld [vmem:[%s5 + $0x58] sm:$0xff]
  %v279 = vld [vmem:[%s5 + $0x60] sm:$0xff]
  %v280 = vld [vmem:[%s5 + $0x68] sm:$0xff]
  %v281 = vld [vmem:[%s5 + $0x70] sm:$0xff]
  %v282 = vld [vmem:[%s5 + $0x78] sm:$0xff]
  %v283 = vld [vmem:[%s5 + $0x80] sm:$0xff]
  %v284 = vld [vmem:[%s5 + $0x88] sm:$0xff]
  %v285 = vld [vmem:[%s5 + $0x90] sm:$0xff]
  %v286 = vld [vmem:[%s5 + $0x98] sm:$0xff]
  %v287 = vld [vmem:[%s5 + $0xa0] sm:$0xff]
  %v288 = vld [vmem:[%s5 + $0xa8] sm:$0xff]
  %v289 = vld [vmem:[%s5 + $0xb0] sm:$0xff]
  %v290 = vld [vmem:[%s5 + $0xb8] sm:$0xff]
  %v291 = vld [vmem:[%s5 + $0xc0] sm:$0xff]
  %v292 = vld [vmem:[%s5 + $0xc8] sm:$0xff]
  %v293 = vld [vmem:[%s5 + $0xd0] sm:$0xff]
  %v294 = vld [vmem:[%s5 + $0xd8] sm:$0xff]
  %v295 = vld [vmem:[%s5 + $0xe0] sm:$0xff]
  %v296 = vld [vmem:[%s5 + $0xe8] sm:$0xff]
  %v297 = vld [vmem:[%s5 + $0xf0] sm:$0xff]
  %v298 = vld [vmem:[%s5 + $0xf8] sm:$0xff]
  %299 = vmatprep.subr.mxu0 %v268
  %300 = vmatpush1.msra.mxu0 %v267
  %301 = vmatprep.subr.mxu0 %v270
  %302 = vmatpush1.msra.mxu0 %v269
  %303 = vmatprep.subr.mxu0 %v272
  %304 = vmatpush1.msra.mxu0 %v271
  %305 = vmatprep.subr.mxu0 %v274
  %306 = vmatpush1.msra.mxu0 %v273
  %307 = vmatprep.subr.mxu0 %v276
  %308 = vmatpush1.msra.mxu0 %v275
  %309 = vmatprep.subr.mxu0 %v278
  %310 = vmatpush1.msra.mxu0 %v277
  %311 = vmatprep.subr.mxu0 %v280
  %312 = vmatpush1.msra.mxu0 %v279
  %313 = vmatprep.subr.mxu0 %v282
  %314 = vmatpush1.msra.mxu0 %v281
  %315 = vmatprep.subr.mxu0 %v284
  %316 = vmatpush1.msra.mxu0 %v283
  %317 = vmatprep.subr.mxu0 %v286
  %318 = vmatpush1.msra.mxu0 %v285
  %319 = vmatprep.subr.mxu0 %v288
  %320 = vmatpush1.msra.mxu0 %v287
  %321 = vmatprep.subr.mxu0 %v290
  %322 = vmatpush1.msra.mxu0 %v289
  %323 = vmatprep.subr.mxu0 %v292
  %324 = vmatpush1.msra.mxu0 %v291
  %325 = vmatprep.subr.mxu0 %v294
  %326 = vmatpush1.msra.mxu0 %v293
  %327 = vmatprep.subr.mxu0 %v296
  %328 = vmatpush1.msra.mxu0 %v295
  %329 = vmatprep.subr.mxu0 %v298
  %330 = vmatpush1.msra.mxu0 %v297
  %331 = vmatprep.subr.mxu0 0.0
  %332 = vmatpush1.msra.mxu0 0.0
  %333 = vmatprep.subr.mxu0 0.0
  %334 = vmatpush1.msra.mxu0 0.0
  %335 = vmatprep.subr.mxu0 0.0
  %336 = vmatpush1.msra.mxu0 0.0
  %337 = vmatprep.subr.mxu0 0.0
  %338 = vmatpush1.msra.mxu0 0.0
  %339 = vmatprep.subr.mxu0 0.0
  %340 = vmatpush1.msra.mxu0 0.0
  %341 = vmatprep.subr.mxu0 0.0
  %342 = vmatpush1.msra.mxu0 0.0
  %343 = vmatprep.subr.mxu0 0.0
  %344 = vmatpush1.msra.mxu0 0.0
  %345 = vmatprep.subr.mxu0 0.0
  %346 = vmatpush1.msra.mxu0 0.0
  %347 = vmatprep.subr.mxu0 0.0
  %348 = vmatpush1.msra.mxu0 0.0
  %349 = vmatprep.subr.mxu0 0.0
  %350 = vmatpush1.msra.mxu0 0.0
  %351 = vmatprep.subr.mxu0 0.0
  %352 = vmatpush1.msra.mxu0 0.0
  %353 = vmatprep.subr.mxu0 0.0
  %354 = vmatpush1.msra.mxu0 0.0
  %355 = vmatprep.subr.mxu0 0.0
  %356 = vmatpush1.msra.mxu0 0.0
  %357 = vmatprep.subr.mxu0 0.0
  %358 = vmatpush1.msra.mxu0 0.0
  %359 = vmatprep.subr.mxu0 0.0
  %360 = vmatpush1.msra.mxu0 0.0
  %361 = vmatprep.subr.mxu0 0.0
  %362 = vmatpush1.msra.mxu0 0.0
  %363 = vmatprep.mubr.f32.mxu0 0.0
  %364 = vmatmul.mubr.f32.gmra.mrb[0].mxu0 %v266
  %v365 = vpop.f32.mrb[0].mxu0
  %v366 = vadd.f32 0.0, %v365
  %v367 = vpop.f32.mrb[0].mxu0
  %v368 = vadd.f32 0.0, %v367
  %369 = vdwg.mxu0
  %v370 = vld [vmem:[%s3] sm:$0xff]
  %v371 = vld [vmem:[%s3 + $0x8] sm:$0xff]
  %v372 = vld [vmem:[%s3 + $0x10] sm:$0xff]
  %v373 = vld [vmem:[%s3 + $0x18] sm:$0xff]
  %v374 = vld [vmem:[%s4] sm:$0x1]
  %v376 = vlaneseq
  %v377 = vshrl.u32 %v376, 7
  %v378 = vsub.s32 0, %v377
  %v379 = vrot.slane %v374, %v378
  %v382 = vsel %vm165, %v153, 0
  %v385 = vsel %vm165, %v158, 0
  %387 = vmatprep.subr.mxu0 0.0
  %388 = vmatpush1.msra.mxu0 %v370
  %389 = vmatprep.subr.mxu0 0.0
  %390 = vmatpush1.msra.mxu0 %v371
  %391 = vmatprep.subr.mxu0 0.0
  %392 = vmatpush1.msra.mxu0 %v372
  %393 = vmatprep.subr.mxu0 0.0
  %394 = vmatpush1.msra.mxu0 %v373
  %395 = vmatprep.subr.mxu0 0.0
  %396 = vmatpush1.msra.mxu0 0.0
  %397 = vmatprep.subr.mxu0 0.0
  %398 = vmatpush1.msra.mxu0 0.0
  %399 = vmatprep.subr.mxu0 0.0
  %400 = vmatpush1.msra.mxu0 0.0
  %401 = vmatprep.subr.mxu0 0.0
  %402 = vmatpush1.msra.mxu0 0.0
  %403 = vmatprep.subr.mxu0 0.0
  %404 = vmatpush1.msra.mxu0 0.0
  %405 = vmatprep.subr.mxu0 0.0
  %406 = vmatpush1.msra.mxu0 0.0
  %407 = vmatprep.subr.mxu0 0.0
  %408 = vmatpush1.msra.mxu0 0.0
  %409 = vmatprep.subr.mxu0 0.0
  %410 = vmatpush1.msra.mxu0 0.0
  %411 = vmatprep.subr.mxu0 0.0
  %412 = vmatpush1.msra.mxu0 0.0
  %413 = vmatprep.subr.mxu0 0.0
  %414 = vmatpush1.msra.mxu0 0.0
  %415 = vmatprep.subr.mxu0 0.0
  %416 = vmatpush1.msra.mxu0 0.0
  %417 = vmatprep.subr.mxu0 0.0
  %418 = vmatpush1.msra.mxu0 0.0
  %419 = vmatprep.subr.mxu0 0.0
  %420 = vmatpush1.msra.mxu0 0.0
  %421 = vmatprep.subr.mxu0 0.0
  %422 = vmatpush1.msra.mxu0 0.0
  %423 = vmatprep.subr.mxu0 0.0
  %424 = vmatpush1.msra.mxu0 0.0
  %425 = vmatprep.subr.mxu0 0.0
  %426 = vmatpush1.msra.mxu0 0.0
  %427 = vmatprep.subr.mxu0 0.0
  %428 = vmatpush1.msra.mxu0 0.0
  %429 = vmatprep.subr.mxu0 0.0
  %430 = vmatpush1.msra.mxu0 0.0
  %431 = vmatprep.subr.mxu0 0.0
  %432 = vmatpush1.msra.mxu0 0.0
  %433 = vmatprep.subr.mxu0 0.0
  %434 = vmatpush1.msra.mxu0 0.0
  %435 = vmatprep.subr.mxu0 0.0
  %436 = vmatpush1.msra.mxu0 0.0
  %437 = vmatprep.subr.mxu0 0.0
  %438 = vmatpush1.msra.mxu0 0.0
  %439 = vmatprep.subr.mxu0 0.0
  %440 = vmatpush1.msra.mxu0 0.0
  %441 = vmatprep.subr.mxu0 0.0
  %442 = vmatpush1.msra.mxu0 0.0
  %443 = vmatprep.subr.mxu0 0.0
  %444 = vmatpush1.msra.mxu0 0.0
  %445 = vmatprep.subr.mxu0 0.0
  %446 = vmatpush1.msra.mxu0 0.0
  %447 = vmatprep.subr.mxu0 0.0
  %448 = vmatpush1.msra.mxu0 0.0
  %449 = vmatprep.subr.mxu0 0.0
  %450 = vmatpush1.msra.mxu0 0.0
  %451 = vmatprep.mubr.f32.mxu0 0.0
  %452 = vmatmul.mubr.f32.gmra.mrb[0].mxu0 %v167
  %v453 = vpop.f32.mrb[0].mxu0
  %v454 = vadd.f32 %v379, %v453
  %v455 = vpop.f32.mrb[0].mxu0
  %456 = vmatprep.mubr.f32.mxu0 0.0
  %457 = vmatmul.mubr.f32.gmra.mrb[0].mxu0 %v170
  %v458 = vpop.f32.mrb[0].mxu0
  %v459 = vadd.f32 %v379, %v458
  %v460 = vpop.f32.mrb[0].mxu0
  %461 = vmatprep.mubr.f32.mxu0 0.0
  %462 = vmatmul.mubr.f32.gmra.mrb[0].mxu0 %v382
  %v463 = vpop.f32.mrb[0].mxu0
  %v464 = vadd.f32 %v379, %v463
  %v465 = vpop.f32.mrb[0].mxu0
  %466 = vmatprep.mubr.f32.mxu0 0.0
  %467 = vmatmul.mubr.f32.gmra.mrb[0].mxu0 %v385
  %v468 = vpop.f32.mrb[0].mxu0
  %v469 = vadd.f32 %v379, %v468
  %v470 = vpop.f32.mrb[0].mxu0
  %471 = vdwg.mxu0
  %v472 = vlaneseq
  %v473 = vshrl.u32 %v472, 7
  %v474 = vsub.s32 0, %v473
  %v475 = vrot.slane %v366, %v474
  %v476 = vadd.f32 %v454, %v475
  %v477 = vlaneseq
  %v478 = vshrl.u32 %v477, 7
  %v479 = vsub.s32 1, %v478
  %v480 = vrot.slane %v366, %v479
  %v481 = vadd.f32 %v459, %v480
  %v482 = vadd.f32 %v464, %v475
  %v483 = vadd.f32 %v469, %v475
  %v484 = vadd.f32 %v464, %v480
  %v485 = vadd.f32 %v469, %v480
  %v486 = vmax.f32 %v476, 0.0
  %v487 = vmax.f32 %v481, 0.0
  %v488 = vmax.f32 %v482, 0.0
  %v489 = vmax.f32 %v483, 0.0
  %v490 = vmax.f32 %v484, 0.0
  %v491 = vmax.f32 %v485, 0.0
  %v492 = vld [vmem:[%s6] sm:$0xff]
  %v493 = vld [vmem:[%s6 + $0x8] sm:$0xff]
  %v494 = vld [vmem:[%s6 + $0x10] sm:$0xff]
  %v495 = vld [vmem:[%s6 + $0x18] sm:$0xff]
  %v496 = vld [vmem:[%s6 + $0x20] sm:$0xff]
  %v497 = vld [vmem:[%s6 + $0x28] sm:$0xff]
  %v498 = vld [vmem:[%s6 + $0x30] sm:$0xff]
  %v499 = vld [vmem:[%s6 + $0x38] sm:$0xff]
  %v500 = vld [vmem:[%s6 + $0x40] sm:$0xff]
  %v501 = vld [vmem:[%s6 + $0x48] sm:$0xff]
  %v502 = vld [vmem:[%s6 + $0x50] sm:$0xff]
  %v503 = vld [vmem:[%s6 + $0x58] sm:$0xff]
  %v504 = vld [vmem:[%s6 + $0x60] sm:$0xff]
  %v505 = vld [vmem:[%s6 + $0x68] sm:$0xff]
  %v506 = vld [vmem:[%s6 + $0x70] sm:$0xff]
  %v507 = vld [vmem:[%s6 + $0x78] sm:$0xff]
  %508 = vmatprep.subr.mxu0 0.0
  %509 = vmatpush1.msra.mxu0 %v492
  %510 = vmatprep.subr.mxu0 0.0
  %511 = vmatpush1.msra.mxu0 %v493
  %512 = vmatprep.subr.mxu0 0.0
  %513 = vmatpush1.msra.mxu0 %v494
  %514 = vmatprep.subr.mxu0 0.0
  %515 = vmatpush1.msra.mxu0 %v495
  %516 = vmatprep.subr.mxu0 0.0
  %517 = vmatpush1.msra.mxu0 %v496
  %518 = vmatprep.subr.mxu0 0.0
  %519 = vmatpush1.msra.mxu0 %v497
  %520 = vmatprep.subr.mxu0 0.0
  %521 = vmatpush1.msra.mxu0 %v498
  %522 = vmatprep.subr.mxu0 0.0
  %523 = vmatpush1.msra.mxu0 %v499
  %524 = vmatprep.subr.mxu0 0.0
  %525 = vmatpush1.msra.mxu0 %v500
  %526 = vmatprep.subr.mxu0 0.0
  %527 = vmatpush1.msra.mxu0 %v501
  %528 = vmatprep.subr.mxu0 0.0
  %529 = vmatpush1.msra.mxu0 %v502
  %530 = vmatprep.subr.mxu0 0.0
  %531 = vmatpush1.msra.mxu0 %v503
  %532 = vmatprep.subr.mxu0 0.0
  %533 = vmatpush1.msra.mxu0 %v504
  %534 = vmatprep.subr.mxu0 0.0
  %535 = vmatpush1.msra.mxu0 %v505
  %536 = vmatprep.subr.mxu0 0.0
  %537 = vmatpush1.msra.mxu0 %v506
  %538 = vmatprep.subr.mxu0 0.0
  %539 = vmatpush1.msra.mxu0 %v507
  %540 = vmatprep.subr.mxu0 0.0
  %541 = vmatpush1.msra.mxu0 0.0
  %542 = vmatprep.subr.mxu0 0.0
  %543 = vmatpush1.msra.mxu0 0.0
  %544 = vmatprep.subr.mxu0 0.0
  %545 = vmatpush1.msra.mxu0 0.0
  %546 = vmatprep.subr.mxu0 0.0
  %547 = vmatpush1.msra.mxu0 0.0
  %548 = vmatprep.subr.mxu0 0.0
  %549 = vmatpush1.msra.mxu0 0.0
  %550 = vmatprep.subr.mxu0 0.0
  %551 = vmatpush1.msra.mxu0 0.0
  %552 = vmatprep.subr.mxu0 0.0
  %553 = vmatpush1.msra.mxu0 0.0
  %554 = vmatprep.subr.mxu0 0.0
  %555 = vmatpush1.msra.mxu0 0.0
  %556 = vmatprep.subr.mxu0 0.0
  %557 = vmatpush1.msra.mxu0 0.0
  %558 = vmatprep.subr.mxu0 0.0
  %559 = vmatpush1.msra.mxu0 0.0
  %560 = vmatprep.subr.mxu0 0.0
  %561 = vmatpush1.msra.mxu0 0.0
  %562 = vmatprep.subr.mxu0 0.0
  %563 = vmatpush1.msra.mxu0 0.0
  %564 = vmatprep.subr.mxu0 0.0
  %565 = vmatpush1.msra.mxu0 0.0
  %566 = vmatprep.subr.mxu0 0.0
  %567 = vmatpush1.msra.mxu0 0.0
  %568 = vmatprep.subr.mxu0 0.0
  %569 = vmatpush1.msra.mxu0 0.0
  %570 = vmatprep.subr.mxu0 0.0
  %571 = vmatpush1.msra.mxu0 0.0
  %572 = vmatprep.mubr.f32.mxu0 0.0
  %573 = vmatmul.mubr.f32.gmra.mrb[0].mxu0 %v486
  %v574 = vpop.f32.mrb[0].mxu0
  %v575 = vadd.f32 0.0, %v574
  %v576 = vpop.f32.mrb[0].mxu0
  %577 = vmatprep.mubr.f32.mxu0 0.0
  %578 = vmatmul.mubr.f32.gmra.mrb[0].mxu0 %v487
  %v579 = vpop.f32.mrb[0].mxu0
  %v580 = vadd.f32 0.0, %v579
  %v581 = vpop.f32.mrb[0].mxu0
  %582 = vmatprep.mubr.f32.mxu0 0.0
  %583 = vmatmul.mubr.f32.gmra.mrb[0].mxu0 %v488
  %v584 = vpop.f32.mrb[0].mxu0
  %v585 = vadd.f32 0.0, %v584
  %v586 = vpop.f32.mrb[0].mxu0
  %587 = vmatprep.mubr.f32.mxu0 0.0
  %588 = vmatmul.mubr.f32.gmra.mrb[0].mxu0 %v489
  %v589 = vpop.f32.mrb[0].mxu0
  %v590 = vadd.f32 0.0, %v589
  %v591 = vpop.f32.mrb[0].mxu0
  %592 = vmatprep.mubr.f32.mxu0 0.0
  %593 = vmatmul.mubr.f32.gmra.mrb[0].mxu0 %v490
  %v594 = vpop.f32.mrb[0].mxu0
  %v595 = vadd.f32 0.0, %v594
  %v596 = vpop.f32.mrb[0].mxu0
  %597 = vmatprep.mubr.f32.mxu0 0.0
  %598 = vmatmul.mubr.f32.gmra.mrb[0].mxu0 %v491
  %v599 = vpop.f32.mrb[0].mxu0
  %v600 = vadd.f32 0.0, %v599
  %v601 = vpop.f32.mrb[0].mxu0
  %602 = vdwg.mxu0
  %v603 = vmul.f32 %v266, %v266
  %vm604 = vcmask 254976
  %v605 = vsel %vm604, %v603, 0.0
  %606 = vadd.xlane.f32.xlu0 %v605
  %v607 = vpop.xlane.xlu0 %606
  %v608 = vmax.f32 %v607, 1e-16
  %v609 = vrsqrt.pop %v608
  %v610 = vmul.f32 %v266, %v609
  %612 = vrot.lane.b32.xlu0 %v603, 96
  %v613 = vpop.permute.xlu0 %612
  %v615 = vsel %vm604, %v613, 0.0
  %616 = vadd.xlane.f32.xlu0 %v615
  %v617 = vpop.xlane.xlu0 %616
  %v618 = vmax.f32 %v617, 1e-16
  %v619 = vrsqrt.pop %v618
  %v620 = vmul.f32 %v266, %v619
  %621 = vrot.lane.b32.xlu0 %v603, 64
  %v622 = vpop.permute.xlu0 %621
  %v624 = vsel %vm604, %v622, 0.0
  %625 = vadd.xlane.f32.xlu0 %v624
  %v626 = vpop.xlane.xlu0 %625
  %v627 = vmax.f32 %v626, 1e-16
  %v628 = vrsqrt.pop %v627
  %v629 = vmul.f32 %v266, %v628
  %630 = vrot.lane.b32.xlu0 %v603, 32
  %v631 = vpop.permute.xlu0 %630
  %v633 = vsel %vm604, %v631, 0.0
  %634 = vadd.xlane.f32.xlu0 %v633
  %v635 = vpop.xlane.xlu0 %634
  %v636 = vmax.f32 %v635, 1e-16
  %v637 = vrsqrt.pop %v636
  %v638 = vmul.f32 %v266, %v637
  %640 = vrot.lane.b32.xlu0 %v620, 96
  %v641 = vpop.permute.xlu0 %640
  %v643 = vmul.f32 %v610, %v641
  %v644 = vsel %vm604, %v643, 0.0
  %645 = vadd.xlane.f32.xlu0 %v644
  %v646 = vpop.xlane.xlu0 %645
  %vm647 = vcmask 1041408
  %v648 = vsel %vm647, %v646, 0.0
  %v649 = vrot.slane %v648, 4
  %v650 = vadd.f32 %v648, %v649
  %v651 = vrot.slane %v650, 2
  %v652 = vadd.f32 %v650, %v651
  %v653 = vrot.slane %v652, 1
  %v654 = vadd.f32 %v652, %v653
  %v655 = vrcp.pop 2.0
  %v656 = vmul.f32 %v654, %v655
  %v657 = vmax.f32 %v656, 0.0
  %v658 = vadd.f32 %v657, 0.0
  %660 = vrot.lane.b32.xlu0 %v629, 64
  %v661 = vpop.permute.xlu0 %660
  %v663 = vmul.f32 %v610, %v661
  %v664 = vsel %vm604, %v663, 0.0
  %665 = vadd.xlane.f32.xlu0 %v664
  %v666 = vpop.xlane.xlu0 %665
  %v667 = vsel %vm647, %v666, 0.0
  %v668 = vrot.slane %v667, 4
  %v669 = vadd.f32 %v667, %v668
  %v670 = vrot.slane %v669, 2
  %v671 = vadd.f32 %v669, %v670
  %v672 = vrot.slane %v671, 1
  %v673 = vadd.f32 %v671, %v672
  %v674 = vmul.f32 %v673, %v655
  %v675 = vmax.f32 %v674, 0.0
  %v676 = vadd.f32 %v658, %v675
  %678 = vrot.lane.b32.xlu0 %v638, 32
  %v679 = vpop.permute.xlu0 %678
  %v681 = vmul.f32 %v610, %v679
  %v682 = vsel %vm604, %v681, 0.0
  %683 = vadd.xlane.f32.xlu0 %v682
  %v684 = vpop.xlane.xlu0 %683
  %v685 = vsel %vm647, %v684, 0.0
  %v686 = vrot.slane %v685, 4
  %v687 = vadd.f32 %v685, %v686
  %v688 = vrot.slane %v687, 2
  %v689 = vadd.f32 %v687, %v688
  %v690 = vrot.slane %v689, 1
  %v691 = vadd.f32 %v689, %v690
  %v692 = vmul.f32 %v691, %v655
  %v693 = vmax.f32 %v692, 0.0
  %v694 = vadd.f32 %v676, %v693
  %695 = vrot.lane.b32.xlu0 %v629, 96
  %v696 = vpop.permute.xlu0 %695
  %v698 = vmul.f32 %v620, %v696
  %700 = vrot.lane.b32.xlu0 %v698, 96
  %v701 = vpop.permute.xlu0 %700
  %v703 = vsel %vm604, %v701, 0.0
  %704 = vadd.xlane.f32.xlu0 %v703
  %v705 = vpop.xlane.xlu0 %704
  %v706 = vsel %vm647, %v705, 0.0
  %v707 = vrot.slane %v706, 4
  %v708 = vadd.f32 %v706, %v707
  %v709 = vrot.slane %v708, 2
  %v710 = vadd.f32 %v708, %v709
  %v711 = vrot.slane %v710, 1
  %v712 = vadd.f32 %v710, %v711
  %v713 = vmul.f32 %v712, %v655
  %v714 = vmax.f32 %v713, 0.0
  %v715 = vadd.f32 %v694, %v714
  %716 = vrot.lane.b32.xlu0 %v638, 64
  %v717 = vpop.permute.xlu0 %716
  %v719 = vmul.f32 %v620, %v717
  %721 = vrot.lane.b32.xlu0 %v719, 96
  %v722 = vpop.permute.xlu0 %721
  %v724 = vsel %vm604, %v722, 0.0
  %725 = vadd.xlane.f32.xlu0 %v724
  %v726 = vpop.xlane.xlu0 %725
  %v727 = vsel %vm647, %v726, 0.0
  %v728 = vrot.slane %v727, 4
  %v729 = vadd.f32 %v727, %v728
  %v730 = vrot.slane %v729, 2
  %v731 = vadd.f32 %v729, %v730
  %v732 = vrot.slane %v731, 1
  %v733 = vadd.f32 %v731, %v732
  %v734 = vmul.f32 %v733, %v655
  %v735 = vmax.f32 %v734, 0.0
  %v736 = vadd.f32 %v715, %v735
  %737 = vrot.lane.b32.xlu0 %v638, 96
  %v738 = vpop.permute.xlu0 %737
  %v740 = vmul.f32 %v629, %v738
  %742 = vrot.lane.b32.xlu0 %v740, 64
  %v743 = vpop.permute.xlu0 %742
  %v745 = vsel %vm604, %v743, 0.0
  %746 = vadd.xlane.f32.xlu0 %v745
  %v747 = vpop.xlane.xlu0 %746
  %v748 = vsel %vm647, %v747, 0.0
  %v749 = vrot.slane %v748, 4
  %v750 = vadd.f32 %v748, %v749
  %v751 = vrot.slane %v750, 2
  %v752 = vadd.f32 %v750, %v751
  %v753 = vrot.slane %v752, 1
  %v754 = vadd.f32 %v752, %v753
  %v755 = vmul.f32 %v754, %v655
  %v756 = vmax.f32 %v755, 0.0
  %v757 = vadd.f32 %v736, %v756
  %v758 = vmul.f32 %v757, 0.16666667
  %vm759 = vcmask 654336
  %v760 = vsel %vm759, %v368, %v758
  %v761 = vsel %vm165, %v143, 0.0
  %v762 = vsel %vm165, %v148, 0.0
  %v763 = vsel %vm165, %v153, 0.0
  %v764 = vsel %vm165, %v158, 0.0
  %vm765 = vcmask 31744
  %v766 = vsel %vm765, %v575, 0.0
  %v767 = vsel %vm765, %v580, 0.0
  %v768 = vsel %vm765, %v585, 0.0
  %v769 = vsel %vm765, %v590, 0.0
  %v770 = vsel %vm765, %v595, 0.0
  %v771 = vsel %vm765, %v600, 0.0
  %v772 = vsel %vm647, %v760, 0.0
  %773 = vst [vmem:[%s7] sm:$0xff] %v761
  %774 = vst [vmem:[%s7 + $0x8] sm:$0xff] %v762
  %775 = vst [vmem:[%s7 + $0x10] sm:$0xff] %v763
  %776 = vst [vmem:[%s7 + $0x18] sm:$0xff] %v764
  %777 = vst [vmem:[%s7 + $0x20] sm:$0xff] %v766
  %778 = vst [vmem:[%s7 + $0x28] sm:$0xff] %v767
  %779 = vst [vmem:[%s7 + $0x30] sm:$0xff] %v768
  %780 = vst [vmem:[%s7 + $0x38] sm:$0xff] %v769
  %781 = vst [vmem:[%s7 + $0x40] sm:$0xff] %v770
  %782 = vst [vmem:[%s7 + $0x48] sm:$0xff] %v771
  %783 = vst [vmem:[%s7 + $0x50] sm:$0xff] %v772
  // Predicated region
  $region30: #{demand_extraction_forward.1} parent=0 // pred_check
    _
  $region31: #{demand_extraction_forward.1} parent=0 // pred_check_branch
    %785 = sbr.rel (0) target = $region33
  $region32: #{demand_extraction_forward.1} parent=0 // pred_region
    _
  $region33: #{demand_extraction_forward.1} parent=0 // pred_fallthru
    _
  // Predicated region
  $region34: #{demand_extraction_forward.1} parent=0 // pred_check
    _
  $region35: #{demand_extraction_forward.1} parent=0 // pred_check_branch
    %787 = sbr.rel (0) target = $region37
  $region36: #{demand_extraction_forward.1} parent=0 // pred_region
    _
  $region37: #{demand_extraction_forward.1} parent=0 // pred_fallthru
    _

</llo_original>
